<compile_context>
chip_gen: v7x
topology: tpu7x:2x2x1
jax: 0.10.0
libtpu: 0.0.40
codegen_flags: <defaults>
</compile_context>

<pallas_src>
import functools

import jax
import jax.numpy as jnp
from jax.experimental import pallas as pl
from jax.experimental.pallas import tpu as pltpu


# ----------------------------- configuration -------------------------------
_LANE = 128
_PREFERRED_TILE = 4096   # rows per grid step; ~1-2 MiB VMEM/step, far under limits
_SMALL_FANIN = 8         # layers with fan_in <= this run as VPU outer products


def _default_compute_dtype():
    """bf16 only where the VPU/EUP have a bf16 path (v6e / v7x)."""
    try:
        kind = jax.devices()[0].device_kind.lower()
    except Exception:
        return jnp.float32
    if ("v6" in kind) or ("v7" in kind):
        return jnp.bfloat16
    return jnp.float32


# ----------------------------- activations ---------------------------------
def _apply_act(act_fun: int, x):
    if act_fun == 0:
        return jnp.tanh(x)                       # EUP
    if act_fun == 1:
        # sigmoid = 1 / (1 + exp(-x)); keep both the exp and the reciprocal on
        # the EUP slot instead of a VPU divide.
        xf = x.astype(jnp.float32)
        y = pl.reciprocal(1.0 + jnp.exp(-xf), approx=True)
        return y.astype(x.dtype)
    if act_fun == 2:
        return jax.nn.relu(x)                    # VPU max
    if act_fun == 3:
        # TODO(synk): audit jnp.sin lowering on the target chip; if it expands
        # into a long VALU polynomial, swap in a range-reduced EUP-based path.
        return jnp.sin(x)
    raise ValueError(f"unsupported act_fun={act_fun}")


# Pure-JAX activations for the reference check.
_ACT_FNS_REF = {0: jnp.tanh, 1: jax.nn.sigmoid, 2: jax.nn.relu, 3: jnp.sin}


# ------------------------------- the kernel --------------------------------
def _mlp_kernel(*refs, modes, act_fun: int, compute_dtype):
    """refs = (xT_ref, w0, b0, w1, b1, ..., w_{L-1}, b_{L-1}, outT_ref).

    All activations are transposed: (features, batch_tile), batch on lanes.
    `modes[i]` (static) selects the compute path per layer:
      "outer"  : weight (out, in), in<=8  -> unrolled VPU outer products
      "reduce" : weight (in, 1)  (out==1) -> VPU multiply + sublane reduce
      "mxu"    : weight (out, in)         -> MXU matmul, f32 accumulation
    Hidden layers run in `compute_dtype`; the final layer runs in f32.
    """
    x_ref = refs[0]
    out_ref = refs[-1]
    param_refs = refs[1:-1]
    n_layers = len(modes)
    cdt = compute_dtype

    h = x_ref[...].astype(cdt)                                   # (d_in, Bt)
    for layer, mode in enumerate(modes):
        is_last = layer == n_layers - 1
        ldt = jnp.float32 if is_last else cdt
        w = param_refs[2 * layer][...].astype(ldt)
        b = param_refs[2 * layer + 1][...].astype(ldt)           # (out, 1)
        hh = h.astype(ldt)

        if mode == "outer":
            # Degenerate K: no MXU pass, just broadcast multiply-adds.
            in_f = w.shape[1]
            acc = w[:, 0:1] * hh[0:1, :]
            for k in range(1, in_f):
                acc = acc + w[:, k:k + 1] * hh[k:k + 1, :]
            z = acc + b                                          # (out, Bt)
        elif mode == "reduce":
            # Degenerate M (scalar output): w is (in, 1); lane-dense result row.
            z = jnp.sum(w * hh, axis=0, keepdims=True) + b       # (1, Bt)
        else:
            # Real matmul on the MXU, f32 accumulation.
            z = jnp.dot(w, hh, preferred_element_type=jnp.float32) + b

        if is_last:
            h = z
        else:
            h = _apply_act(act_fun, z.astype(cdt))

    out_ref[...] = h.astype(out_ref.dtype)


# ------------------------------ tile picking -------------------------------
def _pick_batch_tile(B: int) -> int:
    if B <= _LANE:
        return _LANE
    # Ensure >= 2 grid steps (both v7x TensorCores busy) but cap at the
    # preferred tile so per-step VMEM stays small and steps stay numerous
    # enough to pipeline.
    half = pl.cdiv((B + 1) // 2, _LANE) * _LANE
    return min(_PREFERRED_TILE, half)


# ------------------------------ the wrappers --------------------------------
def mlp_forward_t(x_t, weights, biases, act_fun, compute_dtype=None):
    """MLP forward with (features, batch) I/O layout (no transposes).

    x_t:     (d_in, B) float32
    weights: list of (out_i, in_i) arrays  (PyTorch nn.Linear layout)
    biases:  list of (out_i, 1) arrays
    Returns: (d_out, B) float32
    """
    if compute_dtype is None:
        compute_dtype = _default_compute_dtype()

    d_in, B = x_t.shape
    d_out = int(weights[-1].shape[0])

    batch_tile = _pick_batch_tile(B)
    B_pad = pl.cdiv(B, batch_tile) * batch_tile
    grid = (B_pad // batch_tile,)

    if B_pad != B:
        x_t = jnp.pad(x_t, ((0, 0), (0, B_pad - B)))

    # Decide per-layer compute mode (static) and lay the weights out for it.
    modes = []
    kernel_params = []
    for w, b in zip(weights, biases):
        out_f, in_f = int(w.shape[0]), int(w.shape[1])
        if in_f <= _SMALL_FANIN:
            modes.append("outer")
            kernel_params.append((w, b))              # (out, in)
        elif out_f == 1:
            modes.append("reduce")
            kernel_params.append((w.T, b))            # (in, 1)
        else:
            modes.append("mxu")
            kernel_params.append((w, b))              # (out, in)
    modes = tuple(modes)

    in_specs = [pl.BlockSpec((d_in, batch_tile), lambda i: (0, i))]
    flat_params = []
    for w, b in kernel_params:
        in_specs.append(pl.BlockSpec(w.shape, lambda i: (0, 0)))
        in_specs.append(pl.BlockSpec(b.shape, lambda i: (0, 0)))
        flat_params.extend([w, b])

    out_specs = pl.BlockSpec((d_out, batch_tile), lambda i: (0, i))

    # Advisory cost estimate so XLA schedules this call sensibly.
    flops = 2 * B_pad * sum(int(w.shape[0]) * int(w.shape[1]) for w in weights)
    transcendentals = B_pad * sum(int(w.shape[0]) for w in weights[:-1])
    param_elems = sum(int(w.size) + int(b.size) for w, b in zip(weights, biases))
    bytes_accessed = 4 * (d_in * B_pad + param_elems + d_out * B_pad)

    kernel = functools.partial(
        _mlp_kernel, modes=modes, act_fun=act_fun, compute_dtype=compute_dtype)

    out_t = pl.pallas_call(
        kernel,
        out_shape=jax.ShapeDtypeStruct((d_out, B_pad), jnp.float32),
        grid=grid,
        in_specs=in_specs,
        out_specs=out_specs,
        compiler_params=pltpu.CompilerParams(
            dimension_semantics=("parallel",),
        ),
        cost_estimate=pl.CostEstimate(
            flops=int(flops),
            transcendentals=int(transcendentals),
            bytes_accessed=int(bytes_accessed),
        ),
    )(x_t, *flat_params)

    return out_t[:, :B]                               # (d_out, B)


def mlp_forward(x, weights, biases, act_fun, compute_dtype=None):
    """PyTorch-layout convenience wrapper: x (B, d_in) -> (B, d_out)."""
    out_t = mlp_forward_t(x.T, weights, biases, act_fun, compute_dtype)
    return out_t.T


# -------------------------- deterministic parameters ------------------------
def init_params(nn_layers, key):
    """PyTorch nn.Linear-style init: U(-1/sqrt(fan_in), 1/sqrt(fan_in)).

    Weights are kept in PyTorch layout (out, in); biases as (out, 1) columns.
    """
    weights, biases = [], []
    for i in range(len(nn_layers) - 1):
        fan_in, fan_out = nn_layers[i], nn_layers[i + 1]
        key, kw, kb = jax.random.split(key, 3)
        bound = 1.0 / jnp.sqrt(jnp.float32(fan_in))
        w = jax.random.uniform(kw, (fan_out, fan_in), jnp.float32, -bound, bound)
        b = jax.random.uniform(kb, (fan_out, 1), jnp.float32, -bound, bound)
        weights.append(w)
        biases.append(b)
    return weights, biases


# --------------------------------- main -------------------------------------
if __name__ == "__main__":
    # Net(parameters=[nn_layers, act_fun]) with nn_layers=[2, 32, 32, 1], Tanh.
    nn_layers = [2, 32, 32, 1]
    act_fun = 0  # Tanh

    key = jax.random.PRNGKey(0)
    key, kx = jax.random.split(key)

    batch = 32
    x = jax.random.normal(kx, (batch, nn_layers[0]), dtype=jnp.float32)

    weights, biases = init_params(nn_layers, key)

    # Reference in plain JAX (same math as the PyTorch module).
    ref = x
    act = _ACT_FNS_REF[act_fun]
    for li, (w, b) in enumerate(zip(weights, biases)):
        ref = ref @ w.T + b.reshape(1, -1)
        if li != len(weights) - 1:
            ref = act(ref)

    # 1) strict f32 path (matches PyTorch numerics).
    out_f32 = mlp_forward(x, weights, biases, act_fun,
                          compute_dtype=jnp.float32)
    out_f32 = jax.block_until_ready(out_f32)
    assert out_f32.shape == (batch, nn_layers[-1])
    assert jnp.allclose(out_f32, ref, atol=1e-5, rtol=1e-5)

    # 2) auto compute-dtype path (bf16 hidden layers on v6e/v7x, f32 elsewhere).
    out_auto = mlp_forward(x, weights, biases, act_fun)
    out_auto = jax.block_until_ready(out_auto)
    assert out_auto.shape == (batch, nn_layers[-1])
    assert bool(jnp.all(jnp.isfinite(out_auto)))
    assert jnp.allclose(out_auto, ref, atol=1e-1, rtol=1e-1)

    print("KERNEL_OK")
</pallas_src>

<mosaic_0001>
module attributes {stable_mosaic.version = 11 : i64} {
  func.func @_mlp_kernel(%arg0: i32, %arg1: memref<2x128xf32, #tpu.memory_space<vmem>>, %arg2: memref<32x2xf32, #tpu.memory_space<vmem>>, %arg3: memref<32x1xf32, #tpu.memory_space<vmem>>, %arg4: memref<32x32xf32, #tpu.memory_space<vmem>>, %arg5: memref<32x1xf32, #tpu.memory_space<vmem>>, %arg6: memref<32x1xf32, #tpu.memory_space<vmem>>, %arg7: memref<1x1xf32, #tpu.memory_space<vmem>>, %arg8: memref<1x128xf32, #tpu.memory_space<vmem>>) attributes {dimension_semantics = [#tpu.dimension_semantics<parallel>], iteration_bounds = array<i64: 1>, scalar_prefetch = 0 : i64, scratch_operands = 0 : i64, tpu.core_type = #tpu.core_type<tc>, window_params = [{transform_indices = @transform_0, window_bounds = array<i64: 2, 128>}, {pipeline_mode = #tpu.pipeline_mode<synchronous>, transform_indices = @transform_1, window_bounds = array<i64: 32, 2>}, {pipeline_mode = #tpu.pipeline_mode<synchronous>, transform_indices = @transform_2, window_bounds = array<i64: 32, 1>}, {pipeline_mode = #tpu.pipeline_mode<synchronous>, transform_indices = @transform_3, window_bounds = array<i64: 32, 32>}, {pipeline_mode = #tpu.pipeline_mode<synchronous>, transform_indices = @transform_4, window_bounds = array<i64: 32, 1>}, {pipeline_mode = #tpu.pipeline_mode<synchronous>, transform_indices = @transform_5, window_bounds = array<i64: 32, 1>}, {pipeline_mode = #tpu.pipeline_mode<synchronous>, transform_indices = @transform_6, window_bounds = array<i64: 1, 1>}, {transform_indices = @transform_7, window_bounds = array<i64: 1, 128>}]} {
    %c0 = arith.constant 0 : index
    %c0_0 = arith.constant 0 : index
    %0 = vector.load %arg1[%c0, %c0_0] : memref<2x128xf32, #tpu.memory_space<vmem>>, vector<2x128xf32>
    %c0_1 = arith.constant 0 : index
    %c0_2 = arith.constant 0 : index
    %1 = vector.load %arg2[%c0_1, %c0_2] : memref<32x2xf32, #tpu.memory_space<vmem>>, vector<32x2xf32>
    %c0_3 = arith.constant 0 : index
    %c0_4 = arith.constant 0 : index
    %2 = vector.load %arg3[%c0_3, %c0_4] : memref<32x1xf32, #tpu.memory_space<vmem>>, vector<32x1xf32>
    %3 = vector.extract_strided_slice %1 {offsets = [0, 0], sizes = [32, 1], strides = [1, 1]} : vector<32x2xf32> to vector<32x1xf32>
    %4 = vector.extract_strided_slice %0 {offsets = [0, 0], sizes = [1, 128], strides = [1, 1]} : vector<2x128xf32> to vector<1x128xf32>
    %5 = vector.broadcast %3 : vector<32x1xf32> to vector<32x128xf32>
    %6 = vector.broadcast %4 : vector<1x128xf32> to vector<32x128xf32>
    %7 = arith.mulf %5, %6 : vector<32x128xf32>
    %8 = vector.extract_strided_slice %1 {offsets = [0, 1], sizes = [32, 1], strides = [1, 1]} : vector<32x2xf32> to vector<32x1xf32>
    %9 = vector.extract_strided_slice %0 {offsets = [1, 0], sizes = [1, 128], strides = [1, 1]} : vector<2x128xf32> to vector<1x128xf32>
    %10 = vector.broadcast %8 : vector<32x1xf32> to vector<32x128xf32>
    %11 = vector.broadcast %9 : vector<1x128xf32> to vector<32x128xf32>
    %12 = arith.mulf %10, %11 : vector<32x128xf32>
    %13 = arith.addf %7, %12 : vector<32x128xf32>
    %14 = vector.broadcast %2 : vector<32x1xf32> to vector<32x128xf32>
    %15 = arith.addf %13, %14 : vector<32x128xf32>
    %16 = math.tanh %15 : vector<32x128xf32>
    %c0_5 = arith.constant 0 : index
    %c0_6 = arith.constant 0 : index
    %17 = vector.load %arg4[%c0_5, %c0_6] : memref<32x32xf32, #tpu.memory_space<vmem>>, vector<32x32xf32>
    %c0_7 = arith.constant 0 : index
    %c0_8 = arith.constant 0 : index
    %18 = vector.load %arg5[%c0_7, %c0_8] : memref<32x1xf32, #tpu.memory_space<vmem>>, vector<32x1xf32>
    %cst = arith.constant dense<0.000000e+00> : vector<32x128xf32>
    %19 = tpu.matmul %17, %16, %cst {dimension_numbers = #tpu.dot_dimension_numbers<[1], [0], [0], [1], [0, 0, 1, 1], [], []>} : vector<32x32xf32>, vector<32x128xf32>, vector<32x128xf32> -> vector<32x128xf32>
    %20 = vector.broadcast %18 : vector<32x1xf32> to vector<32x128xf32>
    %21 = arith.addf %19, %20 : vector<32x128xf32>
    %22 = math.tanh %21 : vector<32x128xf32>
    %c0_9 = arith.constant 0 : index
    %c0_10 = arith.constant 0 : index
    %23 = vector.load %arg6[%c0_9, %c0_10] : memref<32x1xf32, #tpu.memory_space<vmem>>, vector<32x1xf32>
    %c0_11 = arith.constant 0 : index
    %c0_12 = arith.constant 0 : index
    %24 = vector.load %arg7[%c0_11, %c0_12] : memref<1x1xf32, #tpu.memory_space<vmem>>, vector<1x1xf32>
    %25 = vector.broadcast %23 : vector<32x1xf32> to vector<32x128xf32>
    %26 = arith.mulf %25, %22 : vector<32x128xf32>
    %cst_13 = arith.constant dense<0.000000e+00> : vector<128xf32>
    %27 = vector.multi_reduction <add>, %26, %cst_13 [0] : vector<32x128xf32> to vector<128xf32>
    %28 = vector.shape_cast %27 : vector<128xf32> to vector<1x128xf32>
    %29 = vector.broadcast %24 : vector<1x1xf32> to vector<1x128xf32>
    %30 = arith.addf %28, %29 : vector<1x128xf32>
    %c0_14 = arith.constant 0 : index
    %c0_15 = arith.constant 0 : index
    %31 = vector.load %arg8[%c0_14, %c0_15] : memref<1x128xf32, #tpu.memory_space<vmem>>, vector<1x128xf32>
    tpu.vector_store %arg8[%c0_14, %c0_15], %30 {strides = array<i32>} : memref<1x128xf32, #tpu.memory_space<vmem>>, vector<1x128xf32>,
    return
  }
  func.func @transform_0(%arg0: i32) -> (i32, i32) {
    %c0_i32 = arith.constant 0 : i32
    %c0_i32_0 = arith.constant 0 : i32
    return %c0_i32, %arg0 : i32, i32
  }
  func.func @transform_1(%arg0: i32) -> (i32, i32) {
    %c0_i32 = arith.constant 0 : i32
    %c0_i32_0 = arith.constant 0 : i32
    %c0_i32_1 = arith.constant 0 : i32
    return %c0_i32, %c0_i32_0 : i32, i32
  }
  func.func @transform_2(%arg0: i32) -> (i32, i32) {
    %c0_i32 = arith.constant 0 : i32
    %c0_i32_0 = arith.constant 0 : i32
    %c0_i32_1 = arith.constant 0 : i32
    return %c0_i32, %c0_i32_0 : i32, i32
  }
  func.func @transform_3(%arg0: i32) -> (i32, i32) {
    %c0_i32 = arith.constant 0 : i32
    %c0_i32_0 = arith.constant 0 : i32
    %c0_i32_1 = arith.constant 0 : i32
    return %c0_i32, %c0_i32_0 : i32, i32
  }
  func.func @transform_4(%arg0: i32) -> (i32, i32) {
    %c0_i32 = arith.constant 0 : i32
    %c0_i32_0 = arith.constant 0 : i32
    %c0_i32_1 = arith.constant 0 : i32
    return %c0_i32, %c0_i32_0 : i32, i32
  }
  func.func @transform_5(%arg0: i32) -> (i32, i32) {
    %c0_i32 = arith.constant 0 : i32
    %c0_i32_0 = arith.constant 0 : i32
    %c0_i32_1 = arith.constant 0 : i32
    return %c0_i32, %c0_i32_0 : i32, i32
  }
  func.func @transform_6(%arg0: i32) -> (i32, i32) {
    %c0_i32 = arith.constant 0 : i32
    %c0_i32_0 = arith.constant 0 : i32
    %c0_i32_1 = arith.constant 0 : i32
    return %c0_i32, %c0_i32_0 : i32, i32
  }
  func.func @transform_7(%arg0: i32) -> (i32, i32) {
    %c0_i32 = arith.constant 0 : i32
    %c0_i32_0 = arith.constant 0 : i32
    return %c0_i32, %arg0 : i32, i32
  }
}

</mosaic_0001>

<llo_original>
// kernel: tpu_custom_call.1
$region0: #{tpu_custom_call.1}
  #allocation0 [shape = 'u32[]', space=smem, size = 0x4, offset = 0x4, fixed_abs, tag = 'smem constant byte address 0x4 - core index']
  #allocation1 [shape = 'u32[144,128]{1,0:T(1,128)}', space=vmem, size = 0x12000, scoped, tag = 'internal scratch']
  #allocation2 [shape = 'f32[1,1]{1,0:T(1,128)S(1)}', space=vmem, size = 0x200, scoped, tag = 'scoped memory for tpu_custom_call.1']
  %s0 = inlined_call_operand.vmem [shape: f32[2,128], index: 0, kind: input, shape index: {}]
  %s1 = inlined_call_operand.vmem [shape: f32[32,2], index: 1, kind: input, shape index: {}]
  %s2 = inlined_call_operand.vmem [shape: f32[32,1], index: 2, kind: input, shape index: {}]
  %s3 = inlined_call_operand.vmem [shape: f32[32,32], index: 3, kind: input, shape index: {}]
  %s4 = inlined_call_operand.vmem [shape: f32[32,1], index: 4, kind: input, shape index: {}]
  %s5 = inlined_call_operand.vmem [shape: f32[32,1], index: 5, kind: input, shape index: {}]
  %s6 = inlined_call_operand.<no memory space> [shape: f32[1,1], index: 6, kind: input, shape index: {}]
  %s7 = inlined_call_operand.hbm [shape: f32[1,128], index: 7, kind: output, shape index: {}]
  %s8 = sld [smem:[#allocation0]]
  $region38: #{tpu_custom_call.1} parent=0
    _
  %s10 = ssub.s32 1, %s8
  %s11 = scalar_select 0, %s10, %s8
  %v12 = vstv %s6
  %13 = vst [vmem:[#allocation2] sm:$0x1] %v12
  $region1: #{tpu_custom_call.1} parent=0
    #allocation3 [shape = 'u8[512]{0}', space=vmem, size = 0x400, scoped, tag = 'output window, operand 0, single buffered']
    #allocation4 [shape = 's32[1]{0}', space=sflag, size = 0x4, scoped, tag = 'scoped memory for tpu_custom_call.1']
    %14 = vsyncpa [#allocation4], 0
    // Predicated region
    $region2: #{tpu_custom_call.1} parent=1 // pred_check
      _
    $region3: #{tpu_custom_call.1} parent=1 // pred_check_branch
      %16 = sbr.rel (0) target = $region5
    $region4: #{tpu_custom_call.1} parent=1 // pred_region
      _
    $region5: #{tpu_custom_call.1} parent=1 // pred_fallthru
      _
    // Predicated region
    $region6: #{tpu_custom_call.1} parent=1 // pred_check
      _
    $region7: #{tpu_custom_call.1} parent=1 // pred_check_branch
      %18 = sbr.rel (0) target = $region9
    $region8: #{tpu_custom_call.1} parent=1 // pred_region
      _
    $region9: #{tpu_custom_call.1} parent=1 // pred_fallthru
      _
    // Predicated region
    $region10: #{tpu_custom_call.1} parent=1 // pred_check
      _
    $region11: #{tpu_custom_call.1} parent=1 // pred_check_branch
      %20 = sbr.rel (0) target = $region13
    $region12: #{tpu_custom_call.1} parent=1 // pred_region
      _
    $region13: #{tpu_custom_call.1} parent=1 // pred_fallthru
      _
    // Predicated region
    $region14: #{tpu_custom_call.1} parent=1 // pred_check
      _
    $region15: #{tpu_custom_call.1} parent=1 // pred_check_branch
      %22 = sbr.rel (0) target = $region17
    $region16: #{tpu_custom_call.1} parent=1 // pred_region
      _
    $region17: #{tpu_custom_call.1} parent=1 // pred_fallthru
      _
    // Predicated region
    $region18: #{tpu_custom_call.1} parent=1 // pred_check
      _
    $region19: #{tpu_custom_call.1} parent=1 // pred_check_branch
      %24 = sbr.rel (0) target = $region21
    $region20: #{tpu_custom_call.1} parent=1 // pred_region
      _
    $region21: #{tpu_custom_call.1} parent=1 // pred_fallthru
      _
    // Predicated region
    $region22: #{tpu_custom_call.1} parent=1 // pred_check
      _
    $region23: #{tpu_custom_call.1} parent=1 // pred_check_branch
      %26 = sbr.rel (0) target = $region25
    $region24: #{tpu_custom_call.1} parent=1 // pred_region
      _
    $region25: #{tpu_custom_call.1} parent=1 // pred_fallthru
      _
    // Predicated region
    $region26: #{tpu_custom_call.1} parent=1 // pred_check
      _
    $region27: #{tpu_custom_call.1} parent=1 // pred_check_branch
      %28 = sbr.rel (0) target = $region29
    $region28: #{tpu_custom_call.1} parent=1 // pred_region
      _
    $region29: #{tpu_custom_call.1} parent=1 // pred_fallthru
      _
    %v29 = vld [vmem:[%s0] sm:$0x3]
    %v30 = vld [vmem:[%s1] sm:$0xff]
    %v31 = vld [vmem:[%s1 + $0x8] sm:$0xff]
    %v32 = vld [vmem:[%s1 + $0x10] sm:$0xff]
    %v33 = vld [vmem:[%s1 + $0x18] sm:$0xff]
    %v34 = vld [vmem:[%s2] sm:$0xff]
    %v35 = vld [vmem:[%s2 + $0x8] sm:$0xff]
    %v36 = vld [vmem:[%s2 + $0x10] sm:$0xff]
    %v37 = vld [vmem:[%s2 + $0x18] sm:$0xff]
    %39 = vset.pattern.permute.xlu0 0
    %40 = vperm.xlu0 %39, %v30
    %v41 = vpop.permute.xlu0 %40
    %44 = vset.pattern.permute.xlu0 0
    %45 = vperm.xlu0 %44, %v31
    %v46 = vpop.permute.xlu0 %45
    %49 = vset.pattern.permute.xlu0 0
    %50 = vperm.xlu0 %49, %v32
    %v51 = vpop.permute.xlu0 %50
    %54 = vset.pattern.permute.xlu0 0
    %55 = vperm.xlu0 %54, %v33
    %v56 = vpop.permute.xlu0 %55
    %v58 = vlaneseq
    %v59 = vshrl.u32 %v58, 7
    %v60 = vsub.s32 0, %v59
    %v61 = vrot.slane %v29, %v60
    %v62 = vmul.f32 %v41, %v61
    %v63 = vmul.f32 %v46, %v61
    %v64 = vmul.f32 %v51, %v61
    %v65 = vmul.f32 %v56, %v61
    %66 = vset.pattern.permute.xlu0 1
    %67 = vperm.xlu0 %66, %v30
    %v68 = vpop.permute.xlu0 %67
    %70 = vset.pattern.permute.xlu0 1
    %71 = vperm.xlu0 %70, %v31
    %v72 = vpop.permute.xlu0 %71
    %74 = vset.pattern.permute.xlu0 1
    %75 = vperm.xlu0 %74, %v32
    %v76 = vpop.permute.xlu0 %75
    %78 = vset.pattern.permute.xlu0 1
    %79 = vperm.xlu0 %78, %v33
    %v80 = vpop.permute.xlu0 %79
    %v82 = vlaneseq
    %v83 = vshrl.u32 %v82, 7
    %v84 = vsub.s32 1, %v83
    %v85 = vrot.slane %v29, %v84
    %v86 = vmul.f32 %v68, %v85
    %v87 = vmul.f32 %v72, %v85
    %v88 = vmul.f32 %v76, %v85
    %v89 = vmul.f32 %v80, %v85
    %v90 = vadd.f32 %v62, %v86
    %v91 = vadd.f32 %v63, %v87
    %v92 = vadd.f32 %v64, %v88
    %v93 = vadd.f32 %v65, %v89
    %95 = vset.pattern.permute.xlu0 0
    %96 = vperm.xlu0 %95, %v34
    %v97 = vpop.permute.xlu0 %96
    %100 = vset.pattern.permute.xlu0 0
    %101 = vperm.xlu0 %100, %v35
    %v102 = vpop.permute.xlu0 %101
    %105 = vset.pattern.permute.xlu0 0
    %106 = vperm.xlu0 %105, %v36
    %v107 = vpop.permute.xlu0 %106
    %110 = vset.pattern.permute.xlu0 0
    %111 = vperm.xlu0 %110, %v37
    %v112 = vpop.permute.xlu0 %111
    %v114 = vadd.f32 %v90, %v97
    %v115 = vadd.f32 %v91, %v102
    %v116 = vadd.f32 %v92, %v107
    %v117 = vadd.f32 %v93, %v112
    %v118 = vtanh.pop %v114
    %v119 = vtanh.pop %v115
    %v120 = vtanh.pop %v116
    %v121 = vtanh.pop %v117
    %v122 = vld [vmem:[%s3] sm:$0xff]
    %v123 = vld [vmem:[%s3 + $0x8] sm:$0xff]
    %v124 = vld [vmem:[%s3 + $0x10] sm:$0xff]
    %v125 = vld [vmem:[%s3 + $0x18] sm:$0xff]
    %v126 = vld [vmem:[%s4] sm:$0xff]
    %v127 = vld [vmem:[%s4 + $0x8] sm:$0xff]
    %v128 = vld [vmem:[%s4 + $0x10] sm:$0xff]
    %v129 = vld [vmem:[%s4 + $0x18] sm:$0xff]
    %131 = vset.pattern.permute.xlu0 0
    %132 = vperm.xlu0 %131, %v126
    %v133 = vpop.permute.xlu0 %132
    %136 = vset.pattern.permute.xlu0 0
    %137 = vperm.xlu0 %136, %v127
    %v138 = vpop.permute.xlu0 %137
    %141 = vset.pattern.permute.xlu0 0
    %142 = vperm.xlu0 %141, %v128
    %v143 = vpop.permute.xlu0 %142
    %146 = vset.pattern.permute.xlu0 0
    %147 = vperm.xlu0 %146, %v129
    %v148 = vpop.permute.xlu0 %147
    %vm150 = vcmask 261120
    %v152 = vsel %vm150, %v122, 0
    %v155 = vsel %vm150, %v123, 0
    %v158 = vsel %vm150, %v124, 0
    %v161 = vsel %vm150, %v125, 0
    %163 = vmatprep.subr.mxu0 0.0
    %164 = vmatpush1.msra.mxu0 %v118
    %165 = vmatprep.subr.mxu0 0.0
    %166 = vmatpush1.msra.mxu0 %v119
    %167 = vmatprep.subr.mxu0 0.0
    %168 = vmatpush1.msra.mxu0 %v120
    %169 = vmatprep.subr.mxu0 0.0
    %170 = vmatpush1.msra.mxu0 %v121
    %171 = vmatprep.subr.mxu0 0.0
    %172 = vmatpush1.msra.mxu0 0.0
    %173 = vmatprep.subr.mxu0 0.0
    %174 = vmatpush1.msra.mxu0 0.0
    %175 = vmatprep.subr.mxu0 0.0
    %176 = vmatpush1.msra.mxu0 0.0
    %177 = vmatprep.subr.mxu0 0.0
    %178 = vmatpush1.msra.mxu0 0.0
    %179 = vmatprep.subr.mxu0 0.0
    %180 = vmatpush1.msra.mxu0 0.0
    %181 = vmatprep.subr.mxu0 0.0
    %182 = vmatpush1.msra.mxu0 0.0
    %183 = vmatprep.subr.mxu0 0.0
    %184 = vmatpush1.msra.mxu0 0.0
    %185 = vmatprep.subr.mxu0 0.0
    %186 = vmatpush1.msra.mxu0 0.0
    %187 = vmatprep.subr.mxu0 0.0
    %188 = vmatpush1.msra.mxu0 0.0
    %189 = vmatprep.subr.mxu0 0.0
    %190 = vmatpush1.msra.mxu0 0.0
    %191 = vmatprep.subr.mxu0 0.0
    %192 = vmatpush1.msra.mxu0 0.0
    %193 = vmatprep.subr.mxu0 0.0
    %194 = vmatpush1.msra.mxu0 0.0
    %195 = vmatprep.subr.mxu0 0.0
    %196 = vmatpush1.msra.mxu0 0.0
    %197 = vmatprep.subr.mxu0 0.0
    %198 = vmatpush1.msra.mxu0 0.0
    %199 = vmatprep.subr.mxu0 0.0
    %200 = vmatpush1.msra.mxu0 0.0
    %201 = vmatprep.subr.mxu0 0.0
    %202 = vmatpush1.msra.mxu0 0.0
    %203 = vmatprep.subr.mxu0 0.0
    %204 = vmatpush1.msra.mxu0 0.0
    %205 = vmatprep.subr.mxu0 0.0
    %206 = vmatpush1.msra.mxu0 0.0
    %207 = vmatprep.subr.mxu0 0.0
    %208 = vmatpush1.msra.mxu0 0.0
    %209 = vmatprep.subr.mxu0 0.0
    %210 = vmatpush1.msra.mxu0 0.0
    %211 = vmatprep.subr.mxu0 0.0
    %212 = vmatpush1.msra.mxu0 0.0
    %213 = vmatprep.subr.mxu0 0.0
    %214 = vmatpush1.msra.mxu0 0.0
    %215 = vmatprep.subr.mxu0 0.0
    %216 = vmatpush1.msra.mxu0 0.0
    %217 = vmatprep.subr.mxu0 0.0
    %218 = vmatpush1.msra.mxu0 0.0
    %219 = vmatprep.subr.mxu0 0.0
    %220 = vmatpush1.msra.mxu0 0.0
    %221 = vmatprep.subr.mxu0 0.0
    %222 = vmatpush1.msra.mxu0 0.0
    %223 = vmatprep.subr.mxu0 0.0
    %224 = vmatpush1.msra.mxu0 0.0
    %225 = vmatprep.subr.mxu0 0.0
    %226 = vmatpush1.msra.mxu0 0.0
    %227 = vmatprep.mubr.f32.mxu0 0.0
    %228 = vmatmul.mubr.f32.gmra.mrb[0].mxu0 %v152
    %v229 = vpop.f32.mrb[0].mxu0
    %v230 = vadd.f32 %v133, %v229
    %v231 = vpop.f32.mrb[0].mxu0
    %232 = vmatprep.mubr.f32.mxu0 0.0
    %233 = vmatmul.mubr.f32.gmra.mrb[0].mxu0 %v155
    %v234 = vpop.f32.mrb[0].mxu0
    %v235 = vadd.f32 %v138, %v234
    %v236 = vpop.f32.mrb[0].mxu0
    %237 = vmatprep.mubr.f32.mxu0 0.0
    %238 = vmatmul.mubr.f32.gmra.mrb[0].mxu0 %v158
    %v239 = vpop.f32.mrb[0].mxu0
    %v240 = vadd.f32 %v143, %v239
    %v241 = vpop.f32.mrb[0].mxu0
    %242 = vmatprep.mubr.f32.mxu0 0.0
    %243 = vmatmul.mubr.f32.gmra.mrb[0].mxu0 %v161
    %v244 = vpop.f32.mrb[0].mxu0
    %v245 = vadd.f32 %v148, %v244
    %v246 = vpop.f32.mrb[0].mxu0
    %247 = vdwg.mxu0
    %v248 = vtanh.pop %v230
    %v249 = vtanh.pop %v235
    %v250 = vtanh.pop %v240
    %v251 = vtanh.pop %v245
    %v252 = vld [vmem:[%s5] sm:$0xff]
    %v253 = vld [vmem:[%s5 + $0x8] sm:$0xff]
    %v254 = vld [vmem:[%s5 + $0x10] sm:$0xff]
    %v255 = vld [vmem:[%s5 + $0x18] sm:$0xff]
    %v256 = vld [vmem:[#allocation2] sm:$0x1]
    %258 = vset.pattern.permute.xlu0 0
    %259 = vperm.xlu0 %258, %v252
    %v260 = vpop.permute.xlu0 %259
    %263 = vset.pattern.permute.xlu0 0
    %264 = vperm.xlu0 %263, %v253
    %v265 = vpop.permute.xlu0 %264
    %268 = vset.pattern.permute.xlu0 0
    %269 = vperm.xlu0 %268, %v254
    %v270 = vpop.permute.xlu0 %269
    %273 = vset.pattern.permute.xlu0 0
    %274 = vperm.xlu0 %273, %v255
    %v275 = vpop.permute.xlu0 %274
    %v277 = vmul.f32 %v260, %v248
    %v278 = vmul.f32 %v265, %v249
    %v279 = vmul.f32 %v270, %v250
    %v280 = vmul.f32 %v275, %v251
    %v281 = vadd.f32 %v277, %v278
    %v282 = vadd.f32 %v281, %v279
    %v283 = vadd.f32 %v282, %v280
    %v284 = vrot.slane %v283, 4
    %v285 = vadd.f32 %v283, %v284
    %v286 = vrot.slane %v285, 2
    %v287 = vadd.f32 %v285, %v286
    %v288 = vrot.slane %v287, 1
    %v289 = vadd.f32 %v287, %v288
    %291 = vset.pattern.permute.xlu0 0
    %292 = vperm.xlu0 %291, %v256
    %v293 = vpop.permute.xlu0 %292
    %v295 = vlaneseq
    %v296 = vshrl.u32 %v295, 7
    %v297 = vsub.s32 0, %v296
    %v298 = vrot.slane %v293, %v297
    %v299 = vadd.f32 %v289, %v298
    %300 = vst [vmem:[#allocation3] sm:$0x1] %v299
    // Predicated region
    $region30: #{tpu_custom_call.1} parent=1 // pred_check
      _
    $region31: #{tpu_custom_call.1} parent=1 // pred_check_branch
      %302 = sbr.rel (0) target = $region33
    $region32: #{tpu_custom_call.1} parent=1 // pred_region
      %s304 = ssub.s32 16, 16
      %305 = vsyncadd [#allocation4], %s304
      %s307 = sshll.u32 [#allocation3], 4
      %s308 = int_to_ptr.vmem [resolvable:$true] %s307
      %310 = dma.vmem_to_hbm [thread:$0]  %s308, 16, %s7, [#allocation4]
    $region33: #{tpu_custom_call.1} parent=1 // pred_fallthru
      _
    // Predicated region
    $region34: #{tpu_custom_call.1} parent=1 // pred_check
      _
    $region35: #{tpu_custom_call.1} parent=1 // pred_check_branch
      %312 = sbr.rel (0) target = $region37
    $region36: #{tpu_custom_call.1} parent=1 // pred_region
      %313 = dma.done [#allocation4], 16
    $region37: #{tpu_custom_call.1} parent=1 // pred_fallthru
      _
    %314 = vsyncpa [#allocation4], 1

</llo_original>
